<compile_context>
chip_gen: v5e
topology: v5e:2x2
jax: 0.10.0
libtpu: 0.0.40
codegen_flags: <defaults>
</compile_context>

<pallas_src>
import functools

import numpy as np
import jax
import jax.numpy as jnp
from jax import lax
from jax.experimental import pallas as pl
from jax.experimental.pallas import tpu as pltpu


def _round_up(x, m):
    return (x + m - 1) // m * m


def _device_budget():
    """Returns (vmem_limit_bytes, default_row_tile) per TPU generation."""
    vmem = 64 * 1024 * 1024            # conservative fallback (v7x per-TC VMEM)
    try:
        vmem = int(pltpu.get_tpu_info().vmem_capacity_bytes)
    except Exception:
        pass
    if vmem >= 128 * 1024 * 1024:      # v5e / v6e: 128 MiB VMEM -> big tiles
        return 96 * 1024 * 1024, 1024
    return 44 * 1024 * 1024, 512       # v7x: 64 MiB per TensorCore


# ---------------- fused pass (query_input is source_input): project Q|K|V, reduce ----
def _fused_reduce_kernel(hd_pad, x_ref, w_ref, q_ref, kvs_ref, kvsum_ref, ssq_ref):
    # grid = (NC, steps): leading "parallel" axis = per-core partials, inner "arbitrary".
    @pl.when(pl.program_id(1) == 0)
    def _():
        kvs_ref[...] = jnp.zeros_like(kvs_ref)
        kvsum_ref[...] = jnp.zeros_like(kvsum_ref)
        ssq_ref[...] = jnp.zeros_like(ssq_ref)

    # Bias and padded-row zeroing are folded into the augmented X / W (wrapper side),
    # so one MXU matmul yields exact zero rows for padding -> no VPU masking here.
    qkv = jnp.dot(x_ref[...], w_ref[...], preferred_element_type=jnp.float32)
    q = qkv[:, :hd_pad]
    k = qkv[:, hd_pad:2 * hd_pad]
    v = qkv[:, 2 * hd_pad:]

    q_ref[...] = q.astype(q_ref.dtype)                    # staged Q (bf16 when enabled)
    kvs_ref[...] += lax.dot_general(                      # kvs += K^T V (full width)
        k, v, (((0,), (0,)), ((), ())), preferred_element_type=jnp.float32)
    # [k_sum | v_sum] and [||q||^2 | ||k||^2] per lane; f32, pre-downcast values.
    kvsum_ref[...] += jnp.sum(qkv[:, hd_pad:], axis=0, keepdims=True)
    ssq_ref[...] += jnp.sum(jnp.square(qkv[:, :2 * hd_pad]), axis=0, keepdims=True)


# ---------------- pass 1 (separate inputs): project K|V from source rows, reduce -----
def _src_reduce_kernel(hd_pad, x_ref, w_ref, kvs_ref, kvsum_ref, ssqk_ref):
    @pl.when(pl.program_id(1) == 0)
    def _():
        kvs_ref[...] = jnp.zeros_like(kvs_ref)
        kvsum_ref[...] = jnp.zeros_like(kvsum_ref)
        ssqk_ref[...] = jnp.zeros_like(ssqk_ref)

    kv = jnp.dot(x_ref[...], w_ref[...], preferred_element_type=jnp.float32)
    k = kv[:, :hd_pad]
    v = kv[:, hd_pad:]
    kvs_ref[...] += lax.dot_general(
        k, v, (((0,), (0,)), ((), ())), preferred_element_type=jnp.float32)
    kvsum_ref[...] += jnp.sum(kv, axis=0, keepdims=True)           # [k_sum | v_sum]
    ssqk_ref[...] += jnp.sum(jnp.square(k), axis=0, keepdims=True)  # per-lane ||K||^2


# ---------------- pass 2 (separate inputs): project Q, per-tile ||Q||^2 --------------
def _q_project_kernel(x_ref, w_ref, q_ref, ssqq_ref):
    q = jnp.dot(x_ref[...], w_ref[...], preferred_element_type=jnp.float32)
    q_ref[...] = q.astype(q_ref.dtype)
    ssqq_ref[...] = jnp.broadcast_to(
        jnp.sum(jnp.square(q), axis=0, keepdims=True), ssqq_ref.shape)


# ---------------- pass 3: streaming attention output ---------------------------------
def _attn_output_kernel(hd_pad, use_approx_recip,
                        q_ref, ab_ref, add_ref, mean_ref, out_ref):
    q = q_ref[...]
    # Single full-width matmul against the concatenated [A|B] operand, plus the
    # fused additive row [v_sum | +N].
    nd = jnp.dot(q, ab_ref[...], preferred_element_type=jnp.float32) + add_ref[...]
    num = nd[:, :hd_pad]
    den = nd[:, hd_pad:]
    if use_approx_recip:
        r = pl.reciprocal(den, approx=True)
        r = r * (2.0 - den * r)            # one Newton step (EUP + 1 FMA)
    else:
        r = pl.reciprocal(den)
    attn = num * r
    # Head-mean + lane padding fused into one MXU matmul -> lane-dense unmasked store.
    out_ref[...] = jnp.dot(attn.astype(mean_ref.dtype), mean_ref[...],
                           preferred_element_type=jnp.float32)


# ------------------------------------- wrapper ---------------------------------------
def scgraphformer_conv(query_input, source_input, params, *,
                       num_heads, out_channels,
                       tile_rows=None, compute_dtype=jnp.float32,
                       fuse_query_source=None):
    """scGraphformerConv forward (use_weight=True, use_graph=False).

    params = (wq, bq, wk, bk, wv, bv); w*: [Fin, H*D] (pre-transposed), b*: [H*D].
    compute_dtype=jnp.bfloat16 stages X / weights / Q / pass-3 operands in bf16
    (all matmuls on the bf16 MXU pipe, f32 accumulation; norms accumulated in f32).
    """
    wq, bq, wk, bk, wv, bv = params
    H, D = num_heads, out_channels
    HD = H * D
    N, Fin = query_input.shape
    L, Fin_s = source_input.shape
    assert Fin == Fin_s
    f32 = jnp.float32
    cdt = jnp.dtype(compute_dtype)
    bf16_mode = cdt == jnp.dtype(jnp.bfloat16)

    if fuse_query_source is None:
        fuse_query_source = query_input is source_input
    fuse = bool(fuse_query_source) and (N == L)

    vmem_limit, default_tile = _device_budget()
    if tile_rows is None:
        tile_rows = default_tile
    assert tile_rows % 8 == 0

    # Feature dims padded to lane multiples; +1 input column holds the fused
    # bias / valid-row indicator (padded rows project to exact zeros).
    Fp = _round_up(Fin + 1, 128)
    HDp = _round_up(HD, 128)
    Dp = _round_up(D, 128)
    cdtb = cdt.itemsize
    W_src = (3 if fuse else 2) * HDp

    # ---- row tile: biggest that fits the per-generation VMEM budget ----
    T = min(tile_rows, _round_up(max(N, L), 8))
    budget = int(vmem_limit * 0.7)
    fixed = (2 * Fp * max(W_src, HDp) * cdtb           # resident weights (dbl-buffered)
             + 2 * HDp * HDp * 4                       # kvs accumulator block
             + 2 * (HDp * 2 * HDp + HDp * Dp) * cdtb)  # pass-3 resident [A|B], mean
    per_row = (2 * (Fp * cdtb + 2 * HDp * cdtb + Dp * 4)  # DMA buffers (x, q, out)
               + 4 * W_src)                               # in-kernel f32 temporaries
    while T > 64 and fixed + T * per_row > budget:
        T //= 2
    T = max(8, T - T % 8)

    def split(rows):
        nt = pl.cdiv(rows, T)
        nc = 2 if nt >= 2 else 1       # per-core partials (harmless on 1-TC chips)
        steps = pl.cdiv(nt, nc)
        return nc, steps, nc * steps * T

    reduce_params = pltpu.CompilerParams(
        dimension_semantics=("parallel", "arbitrary"),
        vmem_limit_bytes=vmem_limit)

    # ---- wrapper-side padding / augmentation (bias + indicator column, bf16 cast) ---
    def aug_x(x, rows_pad):
        n = x.shape[0]
        xp = jnp.zeros((rows_pad, Fp), f32)
        xp = xp.at[:n, :Fin].set(jnp.asarray(x, f32))
        xp = xp.at[:n, Fin].set(1.0)               # valid-row indicator / bias column
        return xp.astype(cdt)

    def aug_w(ws_and_bs):
        cols = []
        for w, b in ws_and_bs:
            wp = jnp.zeros((Fp, HDp), f32)
            wp = wp.at[:Fin, :HD].set(jnp.asarray(w, f32))
            wp = wp.at[Fin, :HD].set(jnp.asarray(b, f32).reshape(-1))
            cols.append(wp)
        return jnp.concatenate(cols, axis=1).astype(cdt)

    if fuse:
        # ------------- fused pass: single read of X, project Q|K|V, reduce ----------
        NC, steps, Npad = split(N)
        nqt = Npad // T
        x_p = aug_x(query_input, Npad)
        w_qkv = aug_w([(wq, bq), (wk, bk), (wv, bv)])          # [Fp, 3*HDp]

        q_staged, kvs_raw, kvsum_raw, ssq_raw = pl.pallas_call(
            functools.partial(_fused_reduce_kernel, HDp),
            grid=(NC, steps),
            in_specs=[
                pl.BlockSpec((T, Fp), lambda c, j: (c * steps + j, 0)),
                pl.BlockSpec((Fp, 3 * HDp), lambda c, j: (0, 0)),
            ],
            out_specs=[
                pl.BlockSpec((T, HDp), lambda c, j: (c * steps + j, 0)),
                pl.BlockSpec((HDp, HDp), lambda c, j: (c, 0)),
                pl.BlockSpec((8, 2 * HDp), lambda c, j: (c, 0)),
                pl.BlockSpec((8, 2 * HDp), lambda c, j: (c, 0)),
            ],
            out_shape=[
                jax.ShapeDtypeStruct((Npad, HDp), cdt),
                jax.ShapeDtypeStruct((NC * HDp, HDp), f32),
                jax.ShapeDtypeStruct((NC * 8, 2 * HDp), f32),
                jax.ShapeDtypeStruct((NC * 8, 2 * HDp), f32),
            ],
            compiler_params=reduce_params,
        )(x_p, w_qkv)

        kvs = kvs_raw.reshape(NC, HDp, HDp).sum(axis=0)
        kvsum = kvsum_raw.reshape(NC, 8, 2 * HDp)[:, 0, :].sum(axis=0)  # [k_sum|v_sum]
        ssq = ssq_raw.reshape(NC, 8, 2 * HDp)[:, 0, :].sum(axis=0)      # [||q||^2|||k||^2]
        k_sum = kvsum[:HDp]
        v_sum = kvsum[HDp:]
        ssq_q = jnp.sum(ssq[:HDp])
        ssq_k = jnp.sum(ssq[HDp:])
    else:
        # ------------- pass 1: source-side reduction ---------------------------------
        NC, steps, Lpad = split(L)
        s_p = aug_x(source_input, Lpad)
        w_kv = aug_w([(wk, bk), (wv, bv)])                     # [Fp, 2*HDp]

        kvs_raw, kvsum_raw, ssqk_raw = pl.pallas_call(
            functools.partial(_src_reduce_kernel, HDp),
            grid=(NC, steps),
            in_specs=[
                pl.BlockSpec((T, Fp), lambda c, j: (c * steps + j, 0)),
                pl.BlockSpec((Fp, 2 * HDp), lambda c, j: (0, 0)),
            ],
            out_specs=[
                pl.BlockSpec((HDp, HDp), lambda c, j: (c, 0)),
                pl.BlockSpec((8, 2 * HDp), lambda c, j: (c, 0)),
                pl.BlockSpec((8, HDp), lambda c, j: (c, 0)),
            ],
            out_shape=[
                jax.ShapeDtypeStruct((NC * HDp, HDp), f32),
                jax.ShapeDtypeStruct((NC * 8, 2 * HDp), f32),
                jax.ShapeDtypeStruct((NC * 8, HDp), f32),
            ],
            compiler_params=reduce_params,
        )(s_p, w_kv)

        kvs = kvs_raw.reshape(NC, HDp, HDp).sum(axis=0)
        kvsum = kvsum_raw.reshape(NC, 8, 2 * HDp)[:, 0, :].sum(axis=0)
        k_sum = kvsum[:HDp]
        v_sum = kvsum[HDp:]
        ssq_k = jnp.sum(ssqk_raw.reshape(NC, 8, HDp)[:, 0, :])

        # ------------- pass 2: query projection (fully "parallel") -------------------
        # Q is staged (bf16 in bf16 mode) because recomputing it in pass 3 would
        # re-read the wider [*, Fp] input; per-tile ||Q||^2 blocks keep the grid
        # free of accumulators so both v7x TensorCores can shard it.
        Npad = _round_up(N, T)
        nqt = Npad // T
        q_p = aug_x(query_input, Npad)
        w_q = aug_w([(wq, bq)])                                # [Fp, HDp]

        q_staged, ssqq_raw = pl.pallas_call(
            _q_project_kernel,
            grid=(nqt,),
            in_specs=[
                pl.BlockSpec((T, Fp), lambda i: (i, 0)),
                pl.BlockSpec((Fp, HDp), lambda i: (0, 0)),
            ],
            out_specs=[
                pl.BlockSpec((T, HDp), lambda i: (i, 0)),
                pl.BlockSpec((8, HDp), lambda i: (i, 0)),
            ],
            out_shape=[
                jax.ShapeDtypeStruct((Npad, HDp), cdt),
                jax.ShapeDtypeStruct((nqt * 8, HDp), f32),
            ],
            compiler_params=pltpu.CompilerParams(
                dimension_semantics=("parallel",),
                vmem_limit_bytes=vmem_limit),
        )(q_p, w_q)
        ssq_q = jnp.sum(ssqq_raw.reshape(nqt, 8, HDp)[:, 0, :])

    # ---------------- tiny glue (layout plumbing on [HDp,HDp]-sized state) -----------
    scale = 1.0 / jnp.sqrt(ssq_q * ssq_k)          # = 1/(||Q||_F * ||K||_F)

    idx = np.arange(HDp)
    head_of = idx // D
    block_mask = ((head_of[:, None] == head_of[None, :])
                  & (idx[:, None] < HD) & (idx[None, :] < HD)).astype(np.float32)
    block_mask = jnp.asarray(block_mask)

    a_mat = kvs * block_mask * scale                           # numerator operand
    b_mat = (k_sum[:, None] * block_mask) * scale              # denominator operand
    ab_mat = jnp.concatenate([a_mat, b_mat], axis=1).astype(cdt)   # [HDp, 2*HDp]

    add_row = jnp.concatenate(
        [v_sum, jnp.full((HDp,), float(N), f32)]).reshape(1, 2 * HDp)  # [v_sum | +N]

    mean_np = np.zeros((HDp, Dp), np.float32)      # head-mean fused with 128-lane pad
    rows = (np.arange(H)[:, None] * D + np.arange(D)[None, :]).reshape(-1)
    cols = np.tile(np.arange(D), H)
    mean_np[rows, cols] = 1.0 / H
    mean_mat = jnp.asarray(mean_np).astype(cdt)

    # ---------------- pass 3: stream query tiles -> output ---------------------------
    out_padded = pl.pallas_call(
        functools.partial(_attn_output_kernel, HDp, bf16_mode),
        grid=(nqt,),
        in_specs=[
            pl.BlockSpec((T, HDp), lambda i: (i, 0)),
            pl.BlockSpec((HDp, 2 * HDp), lambda i: (0, 0)),
            pl.BlockSpec((1, 2 * HDp), lambda i: (0, 0)),
            pl.BlockSpec((HDp, Dp), lambda i: (0, 0)),
        ],
        out_specs=pl.BlockSpec((T, Dp), lambda i: (i, 0)),
        out_shape=jax.ShapeDtypeStruct((Npad, Dp), f32),
        compiler_params=pltpu.CompilerParams(
            dimension_semantics=("parallel",),
            vmem_limit_bytes=vmem_limit),
    )(q_staged, ab_mat, add_row, mean_mat)

    return out_padded[:N, :D]


def scgraphformer_conv_ref(query_input, source_input, params, *, num_heads, out_channels):
    """Pure-JAX reference mirroring the PyTorch forward (use_graph=False)."""
    wq, bq, wk, bk, wv, bv = params
    H, D = num_heads, out_channels
    N = query_input.shape[0]
    qs = (query_input @ wq + jnp.reshape(bq, (1, -1))).reshape(-1, H, D)
    ks = (source_input @ wk + jnp.reshape(bk, (1, -1))).reshape(-1, H, D)
    vs = (source_input @ wv + jnp.reshape(bv, (1, -1))).reshape(-1, H, D)
    qs = qs / jnp.linalg.norm(qs)
    ks = ks / jnp.linalg.norm(ks)
    kvs = jnp.einsum('lhm,lhd->hmd', ks, vs)
    attention_num = jnp.einsum('nhm,hmd->nhd', qs, kvs) + jnp.sum(vs, axis=0)[None, :, :]
    ks_sum = jnp.sum(ks, axis=0)
    attention_normalizer = jnp.einsum('nhm,hm->nh', qs, ks_sum)[..., None] + N
    return (attention_num / attention_normalizer).mean(axis=1)


# TODO(synk): gcn_conv (sparse-adjacency message passing, use_graph=True path) and the
# output_attn=True attention-matrix output are not implemented; this kernel reproduces
# the module's default use_graph=False, output_attn=False forward.

if __name__ == "__main__":
    N = 200              # nodes (query set == source set, as in the module)
    in_channels = 48
    out_channels = 16
    num_heads = 4
    HD = num_heads * out_channels

    key = jax.random.PRNGKey(0)
    k_qi, k_si, k_wq, k_bq, k_wk, k_bk, k_wv, k_bv = jax.random.split(key, 8)

    query_input = jax.random.normal(k_qi, (N, in_channels), dtype=jnp.float32)
    source_input = jax.random.normal(k_si, (N, in_channels), dtype=jnp.float32)

    # nn.Linear-style init; weights stored pre-transposed as [in_features, out_features].
    bound = 1.0 / (in_channels ** 0.5)

    def lin_init(kw, kb):
        w = jax.random.uniform(kw, (in_channels, HD), jnp.float32, -bound, bound)
        b = jax.random.uniform(kb, (HD,), jnp.float32, -bound, bound)
        return w, b

    wq, bq = lin_init(k_wq, k_bq)
    wk, bk = lin_init(k_wk, k_bk)
    wv, bv = lin_init(k_wv, k_bv)
    params = (wq, bq, wk, bk, wv, bv)

    # 1) separate query/source inputs, f32 (strict tolerance); 64-row tiles exercise
    #    multi-tile streaming and the per-core partial-accumulator split (NC=2).
    out = scgraphformer_conv(query_input, source_input, params,
                             num_heads=num_heads, out_channels=out_channels,
                             tile_rows=64)
    out = jax.block_until_ready(out)
    ref = scgraphformer_conv_ref(query_input, source_input, params,
                                 num_heads=num_heads, out_channels=out_channels)
    assert out.shape == (N, out_channels)
    assert jnp.allclose(out, ref, rtol=1e-4, atol=1e-5), "f32 (separate) mismatch"

    # 2) query is source (module's default usage) -> fused single-read path, f32.
    out_fused = scgraphformer_conv(query_input, query_input, params,
                                   num_heads=num_heads, out_channels=out_channels,
                                   tile_rows=64)
    out_fused = jax.block_until_ready(out_fused)
    ref_fused = scgraphformer_conv_ref(query_input, query_input, params,
                                       num_heads=num_heads, out_channels=out_channels)
    assert jnp.allclose(out_fused, ref_fused, rtol=1e-4, atol=1e-5), "f32 (fused) mismatch"

    # 3) bf16 staging fast path (projection, staged Q and pass-3 operands all bf16;
    #    f32 accumulation everywhere).
    out_bf16 = scgraphformer_conv(query_input, query_input, params,
                                  num_heads=num_heads, out_channels=out_channels,
                                  tile_rows=64, compute_dtype=jnp.bfloat16)
    out_bf16 = jax.block_until_ready(out_bf16)
    assert jnp.allclose(out_bf16, ref_fused, rtol=5e-2, atol=5e-3), "bf16 kernel mismatch"

    print("KERNEL_OK")
</pallas_src>

<mosaic_0001>
module attributes {stable_mosaic.version = 11 : i64} {
  func.func @_src_reduce_kernel(%arg0: i32, %arg1: i32, %arg2: memref<64x128xf32, #tpu.memory_space<vmem>>, %arg3: memref<128x256xf32, #tpu.memory_space<vmem>>, %arg4: memref<128x128xf32, #tpu.memory_space<vmem>>, %arg5: memref<8x256xf32, #tpu.memory_space<vmem>>, %arg6: memref<8x128xf32, #tpu.memory_space<vmem>>) attributes {dimension_semantics = [#tpu.dimension_semantics<parallel>, #tpu.dimension_semantics<arbitrary>], iteration_bounds = array<i64: 2, 2>, scalar_prefetch = 0 : i64, scratch_operands = 0 : i64, tpu.core_type = #tpu.core_type<tc>, window_params = [{transform_indices = @transform_0, window_bounds = array<i64: 64, 128>}, {pipeline_mode = #tpu.pipeline_mode<synchronous>, transform_indices = @transform_1, window_bounds = array<i64: 128, 256>}, {transform_indices = @transform_2, window_bounds = array<i64: 128, 128>}, {transform_indices = @transform_3, window_bounds = array<i64: 8, 256>}, {transform_indices = @transform_4, window_bounds = array<i64: 8, 128>}]} {
    %c0_i32 = arith.constant 0 : i32
    %0 = arith.cmpi eq, %arg1, %c0_i32 : i32
    %1 = arith.extui %0 : i1 to i32
    %c0_i32_0 = arith.constant 0 : i32
    %2 = arith.cmpi ne, %1, %c0_i32_0 : i32
    scf.if %2 {
      %cst_19 = arith.constant 0.000000e+00 : f32
      %25 = vector.broadcast %cst_19 : f32 to vector<128x128xf32>
      %c0_20 = arith.constant 0 : index
      %c0_21 = arith.constant 0 : index
      %26 = vector.load %arg4[%c0_20, %c0_21] : memref<128x128xf32, #tpu.memory_space<vmem>>, vector<128x128xf32>
      tpu.vector_store %arg4[%c0_20, %c0_21], %25 {strides = array<i32>} : memref<128x128xf32, #tpu.memory_space<vmem>>, vector<128x128xf32>,
      %cst_22 = arith.constant 0.000000e+00 : f32
      %27 = vector.broadcast %cst_22 : f32 to vector<8x256xf32>
      %c0_23 = arith.constant 0 : index
      %c0_24 = arith.constant 0 : index
      %28 = vector.load %arg5[%c0_23, %c0_24] : memref<8x256xf32, #tpu.memory_space<vmem>>, vector<8x256xf32>
      tpu.vector_store %arg5[%c0_23, %c0_24], %27 {strides = array<i32>} : memref<8x256xf32, #tpu.memory_space<vmem>>, vector<8x256xf32>,
      %cst_25 = arith.constant 0.000000e+00 : f32
      %29 = vector.broadcast %cst_25 : f32 to vector<8x128xf32>
      %c0_26 = arith.constant 0 : index
      %c0_27 = arith.constant 0 : index
      %30 = vector.load %arg6[%c0_26, %c0_27] : memref<8x128xf32, #tpu.memory_space<vmem>>, vector<8x128xf32>
      tpu.vector_store %arg6[%c0_26, %c0_27], %29 {strides = array<i32>} : memref<8x128xf32, #tpu.memory_space<vmem>>, vector<8x128xf32>,
    } else {
    }
    %c0 = arith.constant 0 : index
    %c0_1 = arith.constant 0 : index
    %3 = vector.load %arg2[%c0, %c0_1] : memref<64x128xf32, #tpu.memory_space<vmem>>, vector<64x128xf32>
    %c0_2 = arith.constant 0 : index
    %c0_3 = arith.constant 0 : index
    %4 = vector.load %arg3[%c0_2, %c0_3] : memref<128x256xf32, #tpu.memory_space<vmem>>, vector<128x256xf32>
    %cst = arith.constant dense<0.000000e+00> : vector<64x256xf32>
    %5 = tpu.matmul %3, %4, %cst {dimension_numbers = #tpu.dot_dimension_numbers<[1], [0], [0], [1], [0, 0, 1, 1], [], []>} : vector<64x128xf32>, vector<128x256xf32>, vector<64x256xf32> -> vector<64x256xf32>
    %6 = vector.extract_strided_slice %5 {offsets = [0, 0], sizes = [64, 128], strides = [1, 1]} : vector<64x256xf32> to vector<64x128xf32>
    %7 = vector.extract_strided_slice %5 {offsets = [0, 128], sizes = [64, 128], strides = [1, 1]} : vector<64x256xf32> to vector<64x128xf32>
    %c0_4 = arith.constant 0 : index
    %c0_5 = arith.constant 0 : index
    %8 = vector.load %arg4[%c0_4, %c0_5] : memref<128x128xf32, #tpu.memory_space<vmem>>, vector<128x128xf32>
    %cst_6 = arith.constant dense<0.000000e+00> : vector<128x128xf32>
    %9 = tpu.matmul %6, %7, %cst_6 {dimension_numbers = #tpu.dot_dimension_numbers<[0], [0], [1], [1], [0, 1, 1, 1], [], []>} : vector<64x128xf32>, vector<64x128xf32>, vector<128x128xf32> -> vector<128x128xf32>
    %10 = arith.addf %8, %9 : vector<128x128xf32>
    %c0_7 = arith.constant 0 : index
    %c0_8 = arith.constant 0 : index
    %11 = vector.load %arg4[%c0_7, %c0_8] : memref<128x128xf32, #tpu.memory_space<vmem>>, vector<128x128xf32>
    tpu.vector_store %arg4[%c0_7, %c0_8], %10 {strides = array<i32>} : memref<128x128xf32, #tpu.memory_space<vmem>>, vector<128x128xf32>,
    %c0_9 = arith.constant 0 : index
    %c0_10 = arith.constant 0 : index
    %12 = vector.load %arg5[%c0_9, %c0_10] : memref<8x256xf32, #tpu.memory_space<vmem>>, vector<8x256xf32>
    %cst_11 = arith.constant dense<0.000000e+00> : vector<256xf32>
    %13 = vector.multi_reduction <add>, %5, %cst_11 [0] : vector<64x256xf32> to vector<256xf32>
    %14 = vector.shape_cast %13 : vector<256xf32> to vector<1x256xf32>
    %15 = vector.broadcast %14 : vector<1x256xf32> to vector<8x256xf32>
    %16 = arith.addf %12, %15 : vector<8x256xf32>
    %c0_12 = arith.constant 0 : index
    %c0_13 = arith.constant 0 : index
    %17 = vector.load %arg5[%c0_12, %c0_13] : memref<8x256xf32, #tpu.memory_space<vmem>>, vector<8x256xf32>
    tpu.vector_store %arg5[%c0_12, %c0_13], %16 {strides = array<i32>} : memref<8x256xf32, #tpu.memory_space<vmem>>, vector<8x256xf32>,
    %c0_14 = arith.constant 0 : index
    %c0_15 = arith.constant 0 : index
    %18 = vector.load %arg6[%c0_14, %c0_15] : memref<8x128xf32, #tpu.memory_space<vmem>>, vector<8x128xf32>
    %19 = arith.mulf %6, %6 : vector<64x128xf32>
    %cst_16 = arith.constant dense<0.000000e+00> : vector<128xf32>
    %20 = vector.multi_reduction <add>, %19, %cst_16 [0] : vector<64x128xf32> to vector<128xf32>
    %21 = vector.shape_cast %20 : vector<128xf32> to vector<1x128xf32>
    %22 = vector.broadcast %21 : vector<1x128xf32> to vector<8x128xf32>
    %23 = arith.addf %18, %22 : vector<8x128xf32>
    %c0_17 = arith.constant 0 : index
    %c0_18 = arith.constant 0 : index
    %24 = vector.load %arg6[%c0_17, %c0_18] : memref<8x128xf32, #tpu.memory_space<vmem>>, vector<8x128xf32>
    tpu.vector_store %arg6[%c0_17, %c0_18], %23 {strides = array<i32>} : memref<8x128xf32, #tpu.memory_space<vmem>>, vector<8x128xf32>,
    return
  }
  func.func @transform_0(%arg0: i32, %arg1: i32) -> (i32, i32) {
    %c2_i32 = arith.constant 2 : i32
    %0 = arith.muli %arg0, %c2_i32 : i32
    %1 = arith.addi %0, %arg1 : i32
    %c0_i32 = arith.constant 0 : i32
    %c0_i32_0 = arith.constant 0 : i32
    return %1, %c0_i32 : i32, i32
  }
  func.func @transform_1(%arg0: i32, %arg1: i32) -> (i32, i32) {
    %c0_i32 = arith.constant 0 : i32
    %c0_i32_0 = arith.constant 0 : i32
    %c0_i32_1 = arith.constant 0 : i32
    return %c0_i32, %c0_i32_0 : i32, i32
  }
  func.func @transform_2(%arg0: i32, %arg1: i32) -> (i32, i32) {
    %c0_i32 = arith.constant 0 : i32
    %c0_i32_0 = arith.constant 0 : i32
    return %arg0, %c0_i32 : i32, i32
  }
  func.func @transform_3(%arg0: i32, %arg1: i32) -> (i32, i32) {
    %c0_i32 = arith.constant 0 : i32
    %c0_i32_0 = arith.constant 0 : i32
    return %arg0, %c0_i32 : i32, i32
  }
  func.func @transform_4(%arg0: i32, %arg1: i32) -> (i32, i32) {
    %c0_i32 = arith.constant 0 : i32
    %c0_i32_0 = arith.constant 0 : i32
    return %arg0, %c0_i32 : i32, i32
  }
}

</mosaic_0001>

<llo_original>
// kernel: tpu_custom_call.1
$region0: #{tpu_custom_call.1}
  #allocation0 [shape = 'u32[]', space=smem, size = 0x4, offset = 0x4, fixed_abs, tag = 'smem constant byte address 0x4 - core index']
  #allocation1 [shape = 'u32[72,128]{1,0:T(1,128)}', space=vmem, size = 0x9000, scoped, tag = 'internal scratch']
  %s0 = inlined_call_operand.hbm [shape: f32[256,128], index: 0, kind: input, shape index: {}]
  %s1 = inlined_call_operand.hbm [shape: f32[128,256], index: 1, kind: input, shape index: {}]
  %s2 = inlined_call_operand.hbm [shape: f32[256,128], index: 2, kind: output, shape index: {0}]
  %s3 = inlined_call_operand.hbm [shape: f32[16,256], index: 3, kind: output, shape index: {1}]
  %s4 = inlined_call_operand.hbm [shape: f32[16,128], index: 4, kind: output, shape index: {2}]
  %5 = xla_tuple %s2, %s3, %s4
  %s6 = sld [smem:[#allocation0]]
  $region69: #{tpu_custom_call.1} parent=0
    _
  %s8 = ssub.s32 1, %s6
  %s9 = scalar_select 0, %s8, %s6
  $region1: #{tpu_custom_call.1} parent=0
    #allocation2 [shape = 'u8[65536]{0}', space=vmem, size = 0x10000, scoped, tag = 'input window, operand 0']
    #allocation3 [shape = 's32[2]{0}', space=sflag, size = 0x8, scoped, tag = 'scoped memory for tpu_custom_call.1']
    #allocation4 [shape = 's32[2]{0}', space=sflag, size = 0x8, scoped, tag = 'scoped memory for tpu_custom_call.1']
    #allocation5 [shape = 'u8[131072]{0}', space=vmem, size = 0x20000, scoped, tag = 'input window, operand 1, single buffered']
    #allocation6 [shape = 's32[1]{0}', space=sflag, size = 0x4, scoped, tag = 'scoped memory for tpu_custom_call.1']
    #allocation7 [shape = 'u8[131072]{0}', space=vmem, size = 0x20000, scoped, tag = 'output window, operand 0']
    #allocation8 [shape = 'u8[16384]{0}', space=vmem, size = 0x4000, scoped, tag = 'output window, operand 1']
    #allocation9 [shape = 's32[2]{0}', space=sflag, size = 0x8, scoped, tag = 'scoped memory for tpu_custom_call.1']
    #allocation10 [shape = 'u8[8192]{0}', space=vmem, size = 0x2000, scoped, tag = 'output window, operand 2']
    %10 = vsyncpa [#allocation3], 0
    %s11 = scalar_lea.sflag [#allocation3], 1
    %12 = vsyncpa %s11, 0
    %13 = vsyncpa [#allocation6], 0
    %14 = vsyncpa [#allocation4], 0
    %s15 = scalar_lea.sflag [#allocation4], 1
    %16 = vsyncpa %s15, 0
    %17 = vsyncpa [#allocation9], 0
    %s18 = scalar_lea.sflag [#allocation9], 1
    %19 = vsyncpa %s18, 0
    loop: start=0, step=1, limit=6
    $region2: #{tpu_custom_call.1} parent=1 // loop_pre_header
      _
    $region3: #{tpu_custom_call.1} parent=1 // loop_header
      %s21 = sphi 0, %s25
      %p22 = scmp.ge.s32.totalorder %s21, 6
      %s28 = sphi 0, %s40
      %s29 = sphi 0, %s36
      %s30 = sphi 0, %s28
      %s31 = sphi 0, %s29
      %s32 = sphi 0, %s30
      %s33 = sphi 0, %s31
      %s47 = sphi 0, %s49
      %s50 = sphi 0, %s47
      %s51 = sphi 0, %s50
      %s67 = sphi 0, %s51
      %s71 = sphi 0, %s71
      %s73 = sphi 0, %s71
      %s74 = sphi 0, %s73
      %s88 = sphi 0, %s74
      %s94 = sphi 0, %s96
      %s97 = sphi 0, %s94
      %s98 = sphi 0, %s97
      %s114 = sphi 0, %s98
      %s120 = sphi 0, %s122
      %s123 = sphi 0, %s120
      %s124 = sphi 0, %s123
      %s140 = sphi 0, %s124
      %s146 = sphi 0, %s148
      %s149 = sphi 0, %s146
      %s150 = sphi 0, %s149
      %s166 = sphi 0, %s150
    $region4: #{tpu_custom_call.1} parent=1 // loop_header_branch
      %24 = sbr.rel (%p22) target = $region8
    $region5: #{tpu_custom_call.1} parent=1 // loop_body
      %s26 = ssub.s32 %s21, 1
      %s27 = ssub.s32 %s21, 2
      %s34 = sadd.s32 1, %s29
      %p35 = scmp.ge.s32.totalorder %s34, 2
      %s36 = scalar_select %p35, 0, %s34
      %s37 = sadd.s32 1, %s28
      %s38 = scalar_select %p35, %s37, %s28
      %p39 = scmp.ge.s32.totalorder %s38, 2
      %s40 = scalar_select %p39, 0, %s38
      %s41 = smul.u32 %s28, 2
      %s42 = sadd.s32 %s41, %s29
      %s43 = smul.u32 %s40, 2
      %s44 = sadd.s32 %s43, %s36
      %s45 = ssub.s32 %s42, %s44
      %p46 = scmp.eq.s32.totalorder %s45, 0
      %s48 = sadd.s32 %s47, 1
      %s49 = scalar_select %p46, %s47, %s48
      %p52 = pneg %p46
      %p53 = scmp.eq.s32.totalorder %s21, 3
      %p54 = por %p52, %p53
      %p55 = scmp.ne.s32.totalorder %s47, %s50
      %p56 = scmp.eq.s32.totalorder %s21, 0
      %p57 = por %p55, %p56
      %p58 = scmp.ne.s32.totalorder %s47, %s50
      %p59 = scmp.eq.s32.totalorder %s26, 3
      %p60 = por %p58, %p59
      %p61 = scmp.ne.s32.totalorder %s50, %s51
      %p62 = scmp.eq.s32.totalorder %s26, 0
      %p63 = por %p61, %p62
      %p64 = scmp.ne.s32.totalorder %s50, %s51
      %p65 = scmp.eq.s32.totalorder %s27, 3
      %p66 = por %p64, %p65
      %p68 = scmp.ne.s32.totalorder %s51, %s67
      %p69 = scmp.eq.s32.totalorder %s27, 0
      %p70 = por %p68, %p69
      %s72 = sadd.s32 %s71, 1
      %p75 = scmp.eq.s32.totalorder %s21, 3
      %p76 = scmp.ne.s32.totalorder %s71, %s73
      %p77 = scmp.eq.s32.totalorder %s21, 0
      %p78 = por %p76, %p77
      %p79 = scmp.ne.s32.totalorder %s71, %s73
      %p80 = scmp.eq.s32.totalorder %s26, 3
      %p81 = por %p79, %p80
      %p82 = scmp.ne.s32.totalorder %s73, %s74
      %p83 = scmp.eq.s32.totalorder %s26, 0
      %p84 = por %p82, %p83
      %p85 = scmp.ne.s32.totalorder %s73, %s74
      %p86 = scmp.eq.s32.totalorder %s27, 3
      %p87 = por %p85, %p86
      %p89 = scmp.ne.s32.totalorder %s74, %s88
      %p90 = scmp.eq.s32.totalorder %s27, 0
      %p91 = por %p89, %p90
      %s92 = ssub.s32 %s28, %s40
      %p93 = scmp.eq.s32.totalorder %s92, 0
      %s95 = sadd.s32 %s94, 1
      %s96 = scalar_select %p93, %s94, %s95
      %p99 = pneg %p93
      %p100 = scmp.eq.s32.totalorder %s21, 3
      %p101 = por %p99, %p100
      %p102 = scmp.ne.s32.totalorder %s94, %s97
      %p103 = scmp.eq.s32.totalorder %s21, 0
      %p104 = por %p102, %p103
      %p105 = scmp.ne.s32.totalorder %s94, %s97
      %p106 = scmp.eq.s32.totalorder %s26, 3
      %p107 = por %p105, %p106
      %p108 = scmp.ne.s32.totalorder %s97, %s98
      %p109 = scmp.eq.s32.totalorder %s26, 0
      %p110 = por %p108, %p109
      %p111 = scmp.ne.s32.totalorder %s97, %s98
      %p112 = scmp.eq.s32.totalorder %s27, 3
      %p113 = por %p111, %p112
      %p115 = scmp.ne.s32.totalorder %s98, %s114
      %p116 = scmp.eq.s32.totalorder %s27, 0
      %p117 = por %p115, %p116
      %s118 = ssub.s32 %s28, %s40
      %p119 = scmp.eq.s32.totalorder %s118, 0
      %s121 = sadd.s32 %s120, 1
      %s122 = scalar_select %p119, %s120, %s121
      %p125 = pneg %p119
      %p126 = scmp.eq.s32.totalorder %s21, 3
      %p127 = por %p125, %p126
      %p128 = scmp.ne.s32.totalorder %s120, %s123
      %p129 = scmp.eq.s32.totalorder %s21, 0
      %p130 = por %p128, %p129
      %p131 = scmp.ne.s32.totalorder %s120, %s123
      %p132 = scmp.eq.s32.totalorder %s26, 3
      %p133 = por %p131, %p132
      %p134 = scmp.ne.s32.totalorder %s123, %s124
      %p135 = scmp.eq.s32.totalorder %s26, 0
      %p136 = por %p134, %p135
      %p137 = scmp.ne.s32.totalorder %s123, %s124
      %p138 = scmp.eq.s32.totalorder %s27, 3
      %p139 = por %p137, %p138
      %p141 = scmp.ne.s32.totalorder %s124, %s140
      %p142 = scmp.eq.s32.totalorder %s27, 0
      %p143 = por %p141, %p142
      %s144 = ssub.s32 %s28, %s40
      %p145 = scmp.eq.s32.totalorder %s144, 0
      %s147 = sadd.s32 %s146, 1
      %s148 = scalar_select %p145, %s146, %s147
      %p151 = pneg %p145
      %p152 = scmp.eq.s32.totalorder %s21, 3
      %p153 = por %p151, %p152
      %p154 = scmp.ne.s32.totalorder %s146, %s149
      %p155 = scmp.eq.s32.totalorder %s21, 0
      %p156 = por %p154, %p155
      %p157 = scmp.ne.s32.totalorder %s146, %s149
      %p158 = scmp.eq.s32.totalorder %s26, 3
      %p159 = por %p157, %p158
      %p160 = scmp.ne.s32.totalorder %s149, %s150
      %p161 = scmp.eq.s32.totalorder %s26, 0
      %p162 = por %p160, %p161
      %p163 = scmp.ne.s32.totalorder %s149, %s150
      %p164 = scmp.eq.s32.totalorder %s27, 3
      %p165 = por %p163, %p164
      %p167 = scmp.ne.s32.totalorder %s150, %s166
      %p168 = scmp.eq.s32.totalorder %s27, 0
      %p169 = por %p167, %p168
      %p170 = scmp.le.s32.totalorder 1, %s21
      %p171 = scmp.lt.s32.totalorder %s21, 5
      %p172 = pnand %p170, %p171
      %p173 = pneg %p172
      // Predicated region
      $region9: #{tpu_custom_call.1} parent=5 // pred_check
        _
      $region10: #{tpu_custom_call.1} parent=5 // pred_check_branch
        %175 = sbr.rel (%p172) target = $region12
      $region11: #{tpu_custom_call.1} parent=5 // pred_region
        %s176 = ssub.s32 %s21, 1
        // Predicated region
        $region13: #{tpu_custom_call.1} parent=11 // pred_check
          %p177 = pneg %p84
        $region14: #{tpu_custom_call.1} parent=11 // pred_check_branch
          %179 = sbr.rel (%p177) target = $region16
        $region15: #{tpu_custom_call.1} parent=11 // pred_region
          %181 = vsyncadd [#allocation6], 0
          %s182 = sshll.u32 %s1, 4
          %s183 = int_to_ptr.hbm [resolvable:$true] %s182
          %s184 = sshll.u32 [#allocation5], 4
          %s185 = int_to_ptr.vmem [resolvable:$true] %s184
          %190 = dma.hbm_to_vmem [thread:$0]  %s183, 4096, %s185, [#allocation6], 256, 256, 16
        $region16: #{tpu_custom_call.1} parent=11 // pred_fallthru
          _
      $region12: #{tpu_custom_call.1} parent=5 // pred_fallthru
        _
      %p191 = scmp.lt.s32.totalorder %s21, 4
      // Predicated region
      $region17: #{tpu_custom_call.1} parent=5 // pred_check
        %p192 = pneg %p191
      $region18: #{tpu_custom_call.1} parent=5 // pred_check_branch
        %194 = sbr.rel (%p192) target = $region20
      $region19: #{tpu_custom_call.1} parent=5 // pred_region
        // Predicated region
        $region21: #{tpu_custom_call.1} parent=19 // pred_check
          %p195 = pneg %p57
        $region22: #{tpu_custom_call.1} parent=19 // pred_check_branch
          %197 = sbr.rel (%p195) target = $region24
        $region23: #{tpu_custom_call.1} parent=19 // pred_region
          %s198 = sand.u32 %s47, 1
          %s199 = scalar_lea.sflag [#allocation3], %s198
          %s200 = sand.u32 %s47, 1
          %s201 = smul.addr %s200, 64
          %s202 = scalar_lea.vmem [#allocation2], %s201
          %s203 = smul.u32 %s28, 2
          %s204 = sadd.s32 %s203, %s29
          %s205 = smul.u32 8, %s204
          %207 = vsyncadd %s199, 0
          %s208 = smul.addr %s205, 8
          %s209 = scalar_lea.hbm %s0, %s208
          %s210 = sshll.u32 %s209, 4
          %s211 = int_to_ptr.hbm [resolvable:$true] %s210
          %s212 = sshll.u32 %s202, 4
          %s213 = int_to_ptr.vmem [resolvable:$true] %s212
          %218 = dma.hbm_to_vmem [thread:$0]  %s211, 1024, %s213, %s199, 128, 128, 8
        $region24: #{tpu_custom_call.1} parent=19 // pred_fallthru
          _
      $region20: #{tpu_custom_call.1} parent=5 // pred_fallthru
        _
      %p219 = scmp.le.s32.totalorder 1, %s21
      %p220 = scmp.lt.s32.totalorder %s21, 5
      %p221 = pnand %p219, %p220
      %p222 = pneg %p221
      // Predicated region
      $region25: #{tpu_custom_call.1} parent=5 // pred_check
        _
      $region26: #{tpu_custom_call.1} parent=5 // pred_check_branch
        %224 = sbr.rel (%p221) target = $region28
      $region27: #{tpu_custom_call.1} parent=5 // pred_region
        %s225 = ssub.s32 %s21, 1
        %s226 = sand.u32 %s50, 1
        %s227 = scalar_lea.sflag [#allocation3], %s226
        %s228 = sand.u32 %s50, 1
        %s229 = smul.addr %s228, 64
        %s230 = scalar_lea.vmem [#allocation2], %s229
        // Predicated region
        $region29: #{tpu_custom_call.1} parent=27 // pred_check
          %p231 = pneg %p63
        $region30: #{tpu_custom_call.1} parent=27 // pred_check_branch
          %233 = sbr.rel (%p231) target = $region32
        $region31: #{tpu_custom_call.1} parent=27 // pred_region
          %235 = dma.done %s227, 1024
        $region32: #{tpu_custom_call.1} parent=27 // pred_fallthru
          _
        // Predicated region
        $region33: #{tpu_custom_call.1} parent=27 // pred_check
          %p236 = pneg %p84
        $region34: #{tpu_custom_call.1} parent=27 // pred_check_branch
          %238 = sbr.rel (%p236) target = $region36
        $region35: #{tpu_custom_call.1} parent=27 // pred_region
          %240 = dma.done [#allocation6], 4096
        $region36: #{tpu_custom_call.1} parent=27 // pred_fallthru
          _
        %s241 = sand.u32 %s50, 1
        %s242 = scalar_lea.sflag [#allocation3], %s241
        %s243 = sand.u32 %s50, 1
        %s244 = smul.addr %s243, 64
        %s245 = scalar_lea.vmem [#allocation2], %s244
        %p246 = pneg %p63
        %p247 = pneg %p60
        %p248 = pneg %p84
        %p249 = pneg %p81
        %p250 = pneg %p110
        %p251 = pneg %p107
        %s252 = sand.u32 %s97, 1
        %s253 = scalar_lea.sflag [#allocation4], %s252
        %s254 = sand.u32 %s97, 1
        %s255 = smul.addr %s254, 128
        %s256 = scalar_lea.vmem [#allocation7], %s255
        %p257 = pneg %p136
        %p258 = pneg %p133
        %s259 = sand.u32 %s26, 1
        %s260 = scalar_lea.sflag [#allocation9], %s259
        %s261 = sand.u32 %s123, 1
        %s262 = smul.addr %s261, 16
        %s263 = scalar_lea.vmem [#allocation8], %s262
        %p264 = pneg %p162
        %p265 = pneg %p159
        %s266 = sand.u32 %s26, 1
        %s267 = scalar_lea.sflag [#allocation9], %s266
        %s268 = sand.u32 %s149, 1
        %s269 = smul.addr %s268, 8
        %s270 = scalar_lea.vmem [#allocation10], %s269
        %s271 = smul.u32 %s30, 2
        %s272 = sadd.s32 %s271, %s31
        %s273 = smul.u32 8, %s272
        %s274 = smul.u32 16, %s30
        %p275 = scmp.eq.s32.totalorder %s31, 0
        // Predicated region
        $region37: #{tpu_custom_call.1} parent=27 // pred_check
          %p276 = pneg %p275
        $region38: #{tpu_custom_call.1} parent=27 // pred_check_branch
          %278 = sbr.rel (%p276) target = $region40
        $region39: #{tpu_custom_call.1} parent=27 // pred_region
          %279 = vst [vmem:[%s256] sm:$0xff] 0.0
          %280 = vst [vmem:[%s256 + $0x8] sm:$0xff] 0.0
          %281 = vst [vmem:[%s256 + $0x10] sm:$0xff] 0.0
          %282 = vst [vmem:[%s256 + $0x18] sm:$0xff] 0.0
          %283 = vst [vmem:[%s256 + $0x20] sm:$0xff] 0.0
          %284 = vst [vmem:[%s256 + $0x28] sm:$0xff] 0.0
          %285 = vst [vmem:[%s256 + $0x30] sm:$0xff] 0.0
          %286 = vst [vmem:[%s256 + $0x38] sm:$0xff] 0.0
          %287 = vst [vmem:[%s256 + $0x40] sm:$0xff] 0.0
          %288 = vst [vmem:[%s256 + $0x48] sm:$0xff] 0.0
          %289 = vst [vmem:[%s256 + $0x50] sm:$0xff] 0.0
          %290 = vst [vmem:[%s256 + $0x58] sm:$0xff] 0.0
          %291 = vst [vmem:[%s256 + $0x60] sm:$0xff] 0.0
          %292 = vst [vmem:[%s256 + $0x68] sm:$0xff] 0.0
          %293 = vst [vmem:[%s256 + $0x70] sm:$0xff] 0.0
          %294 = vst [vmem:[%s256 + $0x78] sm:$0xff] 0.0
          %295 = vst [vmem:[%s263] sm:$0xff] 0.0
          %296 = vst [vmem:[%s263 + $0x8] sm:$0xff] 0.0
          %297 = vst [vmem:[%s270] sm:$0xff] 0.0
        $region40: #{tpu_custom_call.1} parent=27 // pred_fallthru
          _
        %v298 = vld [vmem:[%s230] sm:$0xff]
        %v299 = vld [vmem:[%s230 + $0x8] sm:$0xff]
        %v300 = vld [vmem:[%s230 + $0x10] sm:$0xff]
        %v301 = vld [vmem:[%s230 + $0x18] sm:$0xff]
        %v302 = vld [vmem:[%s230 + $0x20] sm:$0xff]
        %v303 = vld [vmem:[%s230 + $0x28] sm:$0xff]
        %v304 = vld [vmem:[%s230 + $0x30] sm:$0xff]
        %v305 = vld [vmem:[%s230 + $0x38] sm:$0xff]
        %v306 = vld [vmem:[#allocation5] sm:$0xff]
        %v307 = vld [vmem:[#allocation5 + $0x8] sm:$0xff]
        %v308 = vld [vmem:[#allocation5 + $0x10] sm:$0xff]
        %v309 = vld [vmem:[#allocation5 + $0x18] sm:$0xff]
        %v310 = vld [vmem:[#allocation5 + $0x20] sm:$0xff]
        %v311 = vld [vmem:[#allocation5 + $0x28] sm:$0xff]
        %v312 = vld [vmem:[#allocation5 + $0x30] sm:$0xff]
        %v313 = vld [vmem:[#allocation5 + $0x38] sm:$0xff]
        %v314 = vld [vmem:[#allocation5 + $0x40] sm:$0xff]
        %v315 = vld [vmem:[#allocation5 + $0x48] sm:$0xff]
        %v316 = vld [vmem:[#allocation5 + $0x50] sm:$0xff]
        %v317 = vld [vmem:[#allocation5 + $0x58] sm:$0xff]
        %v318 = vld [vmem:[#allocation5 + $0x60] sm:$0xff]
        %v319 = vld [vmem:[#allocation5 + $0x68] sm:$0xff]
        %v320 = vld [vmem:[#allocation5 + $0x70] sm:$0xff]
        %v321 = vld [vmem:[#allocation5 + $0x78] sm:$0xff]
        %v322 = vld [vmem:[#allocation5 + $0x80] sm:$0xff]
        %v323 = vld [vmem:[#allocation5 + $0x88] sm:$0xff]
        %v324 = vld [vmem:[#allocation5 + $0x90] sm:$0xff]
        %v325 = vld [vmem:[#allocation5 + $0x98] sm:$0xff]
        %v326 = vld [vmem:[#allocation5 + $0xa0] sm:$0xff]
        %v327 = vld [vmem:[#allocation5 + $0xa8] sm:$0xff]
        %v328 = vld [vmem:[#allocation5 + $0xb0] sm:$0xff]
        %v329 = vld [vmem:[#allocation5 + $0xb8] sm:$0xff]
        %v330 = vld [vmem:[#allocation5 + $0xc0] sm:$0xff]
        %v331 = vld [vmem:[#allocation5 + $0xc8] sm:$0xff]
        %v332 = vld [vmem:[#allocation5 + $0xd0] sm:$0xff]
        %v333 = vld [vmem:[#allocation5 + $0xd8] sm:$0xff]
        %v334 = vld [vmem:[#allocation5 + $0xe0] sm:$0xff]
        %v335 = vld [vmem:[#allocation5 + $0xe8] sm:$0xff]
        %v336 = vld [vmem:[#allocation5 + $0xf0] sm:$0xff]
        %v337 = vld [vmem:[#allocation5 + $0xf8] sm:$0xff]
        %338 = vmatpush.msra.mxu0 %v336
        %339 = vmatpush.msra.mxu0 %v334
        %340 = vmatpush.msra.mxu0 %v332
        %341 = vmatpush.msra.mxu0 %v330
        %342 = vmatpush.msra.mxu0 %v328
        %343 = vmatpush.msra.mxu0 %v326
        %344 = vmatpush.msra.mxu0 %v324
        %345 = vmatpush.msra.mxu0 %v322
        %346 = vmatpush.msra.mxu0 %v320
        %347 = vmatpush.msra.mxu0 %v318
        %348 = vmatpush.msra.mxu0 %v316
        %349 = vmatpush.msra.mxu0 %v314
        %350 = vmatpush.msra.mxu0 %v312
        %351 = vmatpush.msra.mxu0 %v310
        %352 = vmatpush.msra.mxu0 %v308
        %353 = vmatpush.msra.mxu0 %v306
        %354 = vmatmul.f32.gmra.mxu0 %v298
        %v355 = vpop.f32.mrf.mxu0
        %v356 = vadd.f32 0.0, %v355
        %357 = vmatmul.f32.gmra.mxu0 %v299
        %v358 = vpop.f32.mrf.mxu0
        %v359 = vadd.f32 0.0, %v358
        %360 = vmatmul.f32.gmra.mxu0 %v300
        %v361 = vpop.f32.mrf.mxu0
        %v362 = vadd.f32 0.0, %v361
        %363 = vmatmul.f32.gmra.mxu0 %v301
        %v364 = vpop.f32.mrf.mxu0
        %v365 = vadd.f32 0.0, %v364
        %366 = vmatmul.f32.gmra.mxu0 %v302
        %v367 = vpop.f32.mrf.mxu0
        %v368 = vadd.f32 0.0, %v367
        %369 = vmatmul.f32.gmra.mxu0 %v303
        %v370 = vpop.f32.mrf.mxu0
        %v371 = vadd.f32 0.0, %v370
        %372 = vmatmul.f32.gmra.mxu0 %v304
        %v373 = vpop.f32.mrf.mxu0
        %v374 = vadd.f32 0.0, %v373
        %375 = vmatmul.f32.gmra.mxu0 %v305
        %v376 = vpop.f32.mrf.mxu0
        %v377 = vadd.f32 0.0, %v376
        %378 = vdwg.mxu0
        %379 = vmatpush.msra.mxu0 %v337
        %380 = vmatpush.msra.mxu0 %v335
        %381 = vmatpush.msra.mxu0 %v333
        %382 = vmatpush.msra.mxu0 %v331
        %383 = vmatpush.msra.mxu0 %v329
        %384 = vmatpush.msra.mxu0 %v327
        %385 = vmatpush.msra.mxu0 %v325
        %386 = vmatpush.msra.mxu0 %v323
        %387 = vmatpush.msra.mxu0 %v321
        %388 = vmatpush.msra.mxu0 %v319
        %389 = vmatpush.msra.mxu0 %v317
        %390 = vmatpush.msra.mxu0 %v315
        %391 = vmatpush.msra.mxu0 %v313
        %392 = vmatpush.msra.mxu0 %v311
        %393 = vmatpush.msra.mxu0 %v309
        %394 = vmatpush.msra.mxu0 %v307
        %395 = vmatmul.f32.gmra.mxu0 %v298
        %v396 = vpop.f32.mrf.mxu0
        %v397 = vadd.f32 0.0, %v396
        %398 = vmatmul.f32.gmra.mxu0 %v299
        %v399 = vpop.f32.mrf.mxu0
        %v400 = vadd.f32 0.0, %v399
        %401 = vmatmul.f32.gmra.mxu0 %v300
        %v402 = vpop.f32.mrf.mxu0
        %v403 = vadd.f32 0.0, %v402
        %404 = vmatmul.f32.gmra.mxu0 %v301
        %v405 = vpop.f32.mrf.mxu0
        %v406 = vadd.f32 0.0, %v405
        %407 = vmatmul.f32.gmra.mxu0 %v302
        %v408 = vpop.f32.mrf.mxu0
        %v409 = vadd.f32 0.0, %v408
        %410 = vmatmul.f32.gmra.mxu0 %v303
        %v411 = vpop.f32.mrf.mxu0
        %v412 = vadd.f32 0.0, %v411
        %413 = vmatmul.f32.gmra.mxu0 %v304
        %v414 = vpop.f32.mrf.mxu0
        %v415 = vadd.f32 0.0, %v414
        %416 = vmatmul.f32.gmra.mxu0 %v305
        %v417 = vpop.f32.mrf.mxu0
        %v418 = vadd.f32 0.0, %v417
        %419 = vdwg.mxu0
        %v420 = vld [vmem:[%s256] sm:$0xff]
        %v421 = vld [vmem:[%s256 + $0x8] sm:$0xff]
        %v422 = vld [vmem:[%s256 + $0x10] sm:$0xff]
        %v423 = vld [vmem:[%s256 + $0x18] sm:$0xff]
        %v424 = vld [vmem:[%s256 + $0x20] sm:$0xff]
        %v425 = vld [vmem:[%s256 + $0x28] sm:$0xff]
        %v426 = vld [vmem:[%s256 + $0x30] sm:$0xff]
        %v427 = vld [vmem:[%s256 + $0x38] sm:$0xff]
        %v428 = vld [vmem:[%s256 + $0x40] sm:$0xff]
        %v429 = vld [vmem:[%s256 + $0x48] sm:$0xff]
        %v430 = vld [vmem:[%s256 + $0x50] sm:$0xff]
        %v431 = vld [vmem:[%s256 + $0x58] sm:$0xff]
        %v432 = vld [vmem:[%s256 + $0x60] sm:$0xff]
        %v433 = vld [vmem:[%s256 + $0x68] sm:$0xff]
        %v434 = vld [vmem:[%s256 + $0x70] sm:$0xff]
        %v435 = vld [vmem:[%s256 + $0x78] sm:$0xff]
        %436 = vxpose.xlu0.b32.start [1/16] %v356, 128
        %437 = vxpose.xlu0.b32.cont [2/16] %v359, 128
        %438 = vxpose.xlu0.b32.cont [3/16] %v362, 128
        %439 = vxpose.xlu0.b32.cont [4/16] %v365, 128
        %440 = vxpose.xlu0.b32.cont [5/16] %v368, 128
        %441 = vxpose.xlu0.b32.cont [6/16] %v371, 128
        %442 = vxpose.xlu0.b32.cont [7/16] %v374, 128
        %443 = vxpose.xlu0.b32.cont [8/16] %v377, 128
        %444 = vxpose.xlu0.b32.cont [9/16] 0.0, 128
        %445 = vxpose.xlu0.b32.cont [10/16] 0.0, 128
        %446 = vxpose.xlu0.b32.cont [11/16] 0.0, 128
        %447 = vxpose.xlu0.b32.cont [12/16] 0.0, 128
        %448 = vxpose.xlu0.b32.cont [13/16] 0.0, 128
        %449 = vxpose.xlu0.b32.cont [14/16] 0.0, 128
        %450 = vxpose.xlu0.b32.cont [15/16] 0.0, 128
        %451 = vxpose.xlu0.b32.end [16/16] 0.0, 128
        %v452 = vpop.trf.xlu0
        %v453 = vpop.trf.xlu0
        %v454 = vpop.trf.xlu0
        %v455 = vpop.trf.xlu0
        %v456 = vpop.trf.xlu0
        %v457 = vpop.trf.xlu0
        %v458 = vpop.trf.xlu0
        %v459 = vpop.trf.xlu0
        %v460 = vpop.trf.xlu0
        %v461 = vpop.trf.xlu0
        %v462 = vpop.trf.xlu0
        %v463 = vpop.trf.xlu0
        %v464 = vpop.trf.xlu0
        %v465 = vpop.trf.xlu0
        %v466 = vpop.trf.xlu0
        %v467 = vpop.trf.xlu0
        %vm468 = vcmask 523264
        %v470 = vsel %vm468, %v452, 0
        %v473 = vsel %vm468, %v453, 0
        %v476 = vsel %vm468, %v454, 0
        %v479 = vsel %vm468, %v455, 0
        %v482 = vsel %vm468, %v456, 0
        %v485 = vsel %vm468, %v457, 0
        %v488 = vsel %vm468, %v458, 0
        %v491 = vsel %vm468, %v459, 0
        %v494 = vsel %vm468, %v460, 0
        %v497 = vsel %vm468, %v461, 0
        %v500 = vsel %vm468, %v462, 0
        %v503 = vsel %vm468, %v463, 0
        %v506 = vsel %vm468, %v464, 0
        %v509 = vsel %vm468, %v465, 0
        %v512 = vsel %vm468, %v466, 0
        %v515 = vsel %vm468, %v467, 0
        %517 = vmatpush.msra.mxu0 0.0
        %518 = vmatpush.msra.mxu0 0.0
        %519 = vmatpush.msra.mxu0 0.0
        %520 = vmatpush.msra.mxu0 0.0
        %521 = vmatpush.msra.mxu0 0.0
        %522 = vmatpush.msra.mxu0 0.0
        %523 = vmatpush.msra.mxu0 0.0
        %524 = vmatpush.msra.mxu0 0.0
        %525 = vmatpush.msra.mxu0 %v418
        %526 = vmatpush.msra.mxu0 %v415
        %527 = vmatpush.msra.mxu0 %v412
        %528 = vmatpush.msra.mxu0 %v409
        %529 = vmatpush.msra.mxu0 %v406
        %530 = vmatpush.msra.mxu0 %v403
        %531 = vmatpush.msra.mxu0 %v400
        %532 = vmatpush.msra.mxu0 %v397
        %533 = vmatmul.f32.gmra.mxu0 %v470
        %v534 = vpop.f32.mrf.mxu0
        %v535 = vadd.f32 0.0, %v534
        %536 = vmatmul.f32.gmra.mxu0 %v473
        %v537 = vpop.f32.mrf.mxu0
        %v538 = vadd.f32 0.0, %v537
        %539 = vmatmul.f32.gmra.mxu0 %v476
        %v540 = vpop.f32.mrf.mxu0
        %v541 = vadd.f32 0.0, %v540
        %542 = vmatmul.f32.gmra.mxu0 %v479
        %v543 = vpop.f32.mrf.mxu0
        %v544 = vadd.f32 0.0, %v543
        %545 = vmatmul.f32.gmra.mxu0 %v482
        %v546 = vpop.f32.mrf.mxu0
        %v547 = vadd.f32 0.0, %v546
        %548 = vmatmul.f32.gmra.mxu0 %v485
        %v549 = vpop.f32.mrf.mxu0
        %v550 = vadd.f32 0.0, %v549
        %551 = vmatmul.f32.gmra.mxu0 %v488
        %v552 = vpop.f32.mrf.mxu0
        %v553 = vadd.f32 0.0, %v552
        %554 = vmatmul.f32.gmra.mxu0 %v491
        %v555 = vpop.f32.mrf.mxu0
        %v556 = vadd.f32 0.0, %v555
        %557 = vmatmul.f32.gmra.mxu0 %v494
        %v558 = vpop.f32.mrf.mxu0
        %v559 = vadd.f32 0.0, %v558
        %560 = vmatmul.f32.gmra.mxu0 %v497
        %v561 = vpop.f32.mrf.mxu0
        %v562 = vadd.f32 0.0, %v561
        %563 = vmatmul.f32.gmra.mxu0 %v500
        %v564 = vpop.f32.mrf.mxu0
        %v565 = vadd.f32 0.0, %v564
        %566 = vmatmul.f32.gmra.mxu0 %v503
        %v567 = vpop.f32.mrf.mxu0
        %v568 = vadd.f32 0.0, %v567
        %569 = vmatmul.f32.gmra.mxu0 %v506
        %v570 = vpop.f32.mrf.mxu0
        %v571 = vadd.f32 0.0, %v570
        %572 = vmatmul.f32.gmra.mxu0 %v509
        %v573 = vpop.f32.mrf.mxu0
        %v574 = vadd.f32 0.0, %v573
        %575 = vmatmul.f32.gmra.mxu0 %v512
        %v576 = vpop.f32.mrf.mxu0
        %v577 = vadd.f32 0.0, %v576
        %578 = vmatmul.f32.gmra.mxu0 %v515
        %v579 = vpop.f32.mrf.mxu0
        %v580 = vadd.f32 0.0, %v579
        %581 = vdwg.mxu0
        %v582 = vadd.f32 %v420, %v535
        %v583 = vadd.f32 %v421, %v538
        %v584 = vadd.f32 %v422, %v541
        %v585 = vadd.f32 %v423, %v544
        %v586 = vadd.f32 %v424, %v547
        %v587 = vadd.f32 %v425, %v550
        %v588 = vadd.f32 %v426, %v553
        %v589 = vadd.f32 %v427, %v556
        %v590 = vadd.f32 %v428, %v559
        %v591 = vadd.f32 %v429, %v562
        %v592 = vadd.f32 %v430, %v565
        %v593 = vadd.f32 %v431, %v568
        %v594 = vadd.f32 %v432, %v571
        %v595 = vadd.f32 %v433, %v574
        %v596 = vadd.f32 %v434, %v577
        %v597 = vadd.f32 %v435, %v580
        %598 = vst [vmem:[%s256] sm:$0xff] %v582
        %599 = vst [vmem:[%s256 + $0x8] sm:$0xff] %v583
        %600 = vst [vmem:[%s256 + $0x10] sm:$0xff] %v584
        %601 = vst [vmem:[%s256 + $0x18] sm:$0xff] %v585
        %602 = vst [vmem:[%s256 + $0x20] sm:$0xff] %v586
        %603 = vst [vmem:[%s256 + $0x28] sm:$0xff] %v587
        %604 = vst [vmem:[%s256 + $0x30] sm:$0xff] %v588
        %605 = vst [vmem:[%s256 + $0x38] sm:$0xff] %v589
        %606 = vst [vmem:[%s256 + $0x40] sm:$0xff] %v590
        %607 = vst [vmem:[%s256 + $0x48] sm:$0xff] %v591
        %608 = vst [vmem:[%s256 + $0x50] sm:$0xff] %v592
        %609 = vst [vmem:[%s256 + $0x58] sm:$0xff] %v593
        %610 = vst [vmem:[%s256 + $0x60] sm:$0xff] %v594
        %611 = vst [vmem:[%s256 + $0x68] sm:$0xff] %v595
        %612 = vst [vmem:[%s256 + $0x70] sm:$0xff] %v596
        %613 = vst [vmem:[%s256 + $0x78] sm:$0xff] %v597
        %v614 = vld [vmem:[%s263] sm:$0xff]
        %v615 = vld [vmem:[%s263 + $0x8] sm:$0xff]
        %v616 = vadd.f32 %v356, %v359
        %v617 = vadd.f32 %v616, %v362
        %v618 = vadd.f32 %v617, %v365
        %v619 = vadd.f32 %v618, %v368
        %v620 = vadd.f32 %v619, %v371
        %v621 = vadd.f32 %v620, %v374
        %v622 = vadd.f32 %v621, %v377
        %v623 = vrot.slane %v622, 4
        %v624 = vadd.f32 %v622, %v623
        %v625 = vrot.slane %v624, 2
        %v626 = vadd.f32 %v624, %v625
        %v627 = vrot.slane %v626, 1
        %v628 = vadd.f32 %v626, %v627
        %v629 = vadd.f32 %v397, %v400
        %v630 = vadd.f32 %v629, %v403
        %v631 = vadd.f32 %v630, %v406
        %v632 = vadd.f32 %v631, %v409
        %v633 = vadd.f32 %v632, %v412
        %v634 = vadd.f32 %v633, %v415
        %v635 = vadd.f32 %v634, %v418
        %v636 = vrot.slane %v635, 4
        %v637 = vadd.f32 %v635, %v636
        %v638 = vrot.slane %v637, 2
        %v639 = vadd.f32 %v637, %v638
        %v640 = vrot.slane %v639, 1
        %v641 = vadd.f32 %v639, %v640
        %v642 = vadd.f32 %v614, %v628
        %v643 = vadd.f32 %v615, %v641
        %644 = vst [vmem:[%s263] sm:$0xff] %v642
        %645 = vst [vmem:[%s263 + $0x8] sm:$0xff] %v643
        %v646 = vld [vmem:[%s270] sm:$0xff]
        %v647 = vmul.f32 %v356, %v356
        %v648 = vmul.f32 %v359, %v359
        %v649 = vmul.f32 %v362, %v362
        %v650 = vmul.f32 %v365, %v365
        %v651 = vmul.f32 %v368, %v368
        %v652 = vmul.f32 %v371, %v371
        %v653 = vmul.f32 %v374, %v374
        %v654 = vmul.f32 %v377, %v377
        %v655 = vadd.f32 %v647, %v648
        %v656 = vadd.f32 %v655, %v649
        %v657 = vadd.f32 %v656, %v650
        %v658 = vadd.f32 %v657, %v651
        %v659 = vadd.f32 %v658, %v652
        %v660 = vadd.f32 %v659, %v653
        %v661 = vadd.f32 %v660, %v654
        %v662 = vrot.slane %v661, 4
        %v663 = vadd.f32 %v661, %v662
        %v664 = vrot.slane %v663, 2
        %v665 = vadd.f32 %v663, %v664
        %v666 = vrot.slane %v665, 1
        %v667 = vadd.f32 %v665, %v666
        %v668 = vadd.f32 %v646, %v667
        %669 = vst [vmem:[%s270] sm:$0xff] %v668
        %s670 = sand.u32 %s97, 1
        %s671 = scalar_lea.sflag [#allocation4], %s670
        %s672 = sand.u32 %s97, 1
        %s673 = smul.addr %s672, 128
        %s674 = scalar_lea.vmem [#allocation7], %s673
        %s675 = sand.u32 %s26, 1
        %s676 = scalar_lea.sflag [#allocation9], %s675
        %s677 = sand.u32 %s123, 1
        %s678 = smul.addr %s677, 16
        %s679 = scalar_lea.vmem [#allocation8], %s678
        %s680 = sand.u32 %s26, 1
        %s681 = scalar_lea.sflag [#allocation9], %s680
        %s682 = sand.u32 %s149, 1
        %s683 = smul.addr %s682, 8
        %s684 = scalar_lea.vmem [#allocation10], %s683
        // Predicated region
        $region41: #{tpu_custom_call.1} parent=27 // pred_check
          %p685 = pneg %p107
        $region42: #{tpu_custom_call.1} parent=27 // pred_check_branch
          %687 = sbr.rel (%p685) target = $region44
        $region43: #{tpu_custom_call.1} parent=27 // pred_region
          %s688 = smul.u32 16, %s30
          %690 = vsyncadd %s671, 0
          %s691 = smul.addr %s688, 8
          %s692 = scalar_lea.hbm %s2, %s691
          %s693 = sshll.u32 %s674, 4
          %s694 = int_to_ptr.vmem [resolvable:$true] %s693
          %s695 = sshll.u32 %s692, 4
          %s696 = int_to_ptr.hbm [resolvable:$true] %s695
          %701 = dma.vmem_to_hbm [thread:$0]  %s694, 2048, %s696, %s671, 128, 128, 8
        $region44: #{tpu_custom_call.1} parent=27 // pred_fallthru
          _
        // Predicated region
        $region45: #{tpu_custom_call.1} parent=27 // pred_check
          %p702 = pneg %p133
        $region46: #{tpu_custom_call.1} parent=27 // pred_check_branch
          %704 = sbr.rel (%p702) target = $region48
        $region47: #{tpu_custom_call.1} parent=27 // pred_region
          %706 = vsyncadd %s676, 0
          %s707 = smul.addr %s30, 2
          %s708 = smul.addr %s707, 8
          %s709 = scalar_lea.hbm %s3, %s708
          %s711 = sshll.u32 %s679, 4
          %s712 = int_to_ptr.vmem [resolvable:$true] %s711
          %s713 = sshll.u32 %s709, 4
          %s714 = int_to_ptr.hbm [resolvable:$true] %s713
          %716 = dma.vmem_to_hbm [thread:$0]  %s712, 256, %s714, %s676
        $region48: #{tpu_custom_call.1} parent=27 // pred_fallthru
          _
        // Predicated region
        $region49: #{tpu_custom_call.1} parent=27 // pred_check
          %p717 = pneg %p159
        $region50: #{tpu_custom_call.1} parent=27 // pred_check_branch
          %719 = sbr.rel (%p717) target = $region52
        $region51: #{tpu_custom_call.1} parent=27 // pred_region
          %721 = vsyncadd %s681, 0
          %s722 = smul.addr %s30, 8
          %s723 = scalar_lea.hbm %s4, %s722
          %s725 = sshll.u32 %s684, 4
          %s726 = int_to_ptr.vmem [resolvable:$true] %s725
          %s727 = sshll.u32 %s723, 4
          %s728 = int_to_ptr.hbm [resolvable:$true] %s727
          %730 = dma.vmem_to_hbm [thread:$0]  %s726, 128, %s728, %s681
        $region52: #{tpu_custom_call.1} parent=27 // pred_fallthru
          _
      $region28: #{tpu_custom_call.1} parent=5 // pred_fallthru
        _
      %p731 = scmp.le.s32.totalorder 2, %s21
      // Predicated region
      $region53: #{tpu_custom_call.1} parent=5 // pred_check
        %p732 = pneg %p731
      $region54: #{tpu_custom_call.1} parent=5 // pred_check_branch
        %734 = sbr.rel (%p732) target = $region56
      $region55: #{tpu_custom_call.1} parent=5 // pred_region
        %s735 = ssub.s32 %s21, 2
        // Predicated region
        $region57: #{tpu_custom_call.1} parent=55 // pred_check
          %p736 = pneg %p113
        $region58: #{tpu_custom_call.1} parent=55 // pred_check_branch
          %738 = sbr.rel (%p736) target = $region60
        $region59: #{tpu_custom_call.1} parent=55 // pred_region
          %s739 = sand.u32 %s98, 1
          %s740 = scalar_lea.sflag [#allocation4], %s739
          %s741 = sand.u32 %s98, 1
          %s742 = smul.addr %s741, 128
          %s743 = scalar_lea.vmem [#allocation7], %s742
          %745 = dma.done %s740, 2048
        $region60: #{tpu_custom_call.1} parent=55 // pred_fallthru
          _
        // Predicated region
        $region61: #{tpu_custom_call.1} parent=55 // pred_check
          %p746 = pneg %p139
        $region62: #{tpu_custom_call.1} parent=55 // pred_check_branch
          %748 = sbr.rel (%p746) target = $region64
        $region63: #{tpu_custom_call.1} parent=55 // pred_region
          %s749 = sand.u32 %s27, 1
          %s750 = scalar_lea.sflag [#allocation9], %s749
          %s751 = sand.u32 %s124, 1
          %s752 = smul.addr %s751, 16
          %s753 = scalar_lea.vmem [#allocation8], %s752
          %755 = dma.done %s750, 256
        $region64: #{tpu_custom_call.1} parent=55 // pred_fallthru
          _
        // Predicated region
        $region65: #{tpu_custom_call.1} parent=55 // pred_check
          %p756 = pneg %p165
        $region66: #{tpu_custom_call.1} parent=55 // pred_check_branch
          %758 = sbr.rel (%p756) target = $region68
        $region67: #{tpu_custom_call.1} parent=55 // pred_region
          %s759 = sand.u32 %s27, 1
          %s760 = scalar_lea.sflag [#allocation9], %s759
          %s761 = sand.u32 %s150, 1
          %s762 = smul.addr %s761, 8
          %s763 = scalar_lea.vmem [#allocation10], %s762
          %765 = dma.done %s760, 128
        $region68: #{tpu_custom_call.1} parent=55 // pred_fallthru
          _
      $region56: #{tpu_custom_call.1} parent=5 // pred_fallthru
        _
    $region6: #{tpu_custom_call.1} parent=1 // loop_footer
      %s25 = sadd.s32 1, %s21
    $region7: #{tpu_custom_call.1} parent=1 // loop_footer_branch
      %20 = sbr.rel target = $region3
    $region8: #{tpu_custom_call.1} parent=1 // loop_exit
      _
    %766 = vsyncpa [#allocation3], 1
    %s767 = scalar_lea.sflag [#allocation3], 1
    %768 = vsyncpa %s767, 1
    %769 = vsyncpa [#allocation6], 1
    %770 = vsyncpa [#allocation4], 1
    %s771 = scalar_lea.sflag [#allocation4], 1
    %772 = vsyncpa %s771, 1
    %773 = vsyncpa [#allocation9], 1
    %s774 = scalar_lea.sflag [#allocation9], 1
    %775 = vsyncpa %s774, 1

</llo_original>
